<compile_context>
chip_gen: v5e
topology: v5e:2x2
jax: 0.10.0
libtpu: 0.0.40
codegen_flags: <defaults>
</compile_context>

<pallas_src>
import functools

import jax
import jax.numpy as jnp
import numpy as np
from jax.experimental import pallas as pl
from jax.experimental.pallas import tpu as pltpu


def _first_block_kernel(x_ref, w1_ref, w2_ref, shift_ref, o_ref, *, seg_len):
    # x_ref:     (C_in, N)        f32 input, batch folded into the lane axis
    # w1_ref:    (C_out, K*C_out) bf16 conv1 weights (BN scale folded),
    #                             tap-major, zero columns for channels >= C_in
    # w2_ref:    (C_out, K*C_out) bf16 conv2 weights, tap-major
    # shift_ref: (C_out, 1)       f32 folded eval-mode BatchNorm shift
    # o_ref:     (C_out, N)       f32 output (batch still folded in lanes)
    C_in, N = x_ref.shape
    C_out = o_ref.shape[0]
    K = w1_ref.shape[1] // C_out
    L = seg_len

    # Channel zero-pad of the input, built in-register (also the skip path).
    x_in = x_ref[...]
    if C_out > C_in:
        x = jnp.concatenate(
            [x_in, jnp.zeros((C_out - C_in, N), jnp.float32)], axis=0)
    else:
        x = x_in

    # Hoisted im2col masks: tap j is valid where (lane % L) < L - j.  Computed
    # once as {0,1} f32 and reused by both im2col builds, so each tap costs a
    # single vmul instead of a fresh iota + compare + select per conv.
    pos = jax.lax.broadcasted_iota(jnp.int32, (C_out, N), 1) % L
    masks = [(pos < (L - j)).astype(jnp.float32) for j in range(1, K)]

    def im2col(a):
        # (C_out, N) f32 -> (K*C_out, N) bf16.  Row block j is `a` shifted
        # left by j within each length-L batch segment, zeroed past the
        # segment end (== right-only "same" padding of Conv1dSamePadding).
        cols = [a.astype(jnp.bfloat16)]
        for j in range(1, K):
            rolled = pltpu.roll(a, shift=N - j, axis=1)      # XLU lane rotate
            cols.append((rolled * masks[j - 1]).astype(jnp.bfloat16))
        return jnp.concatenate(cols, axis=0)                 # 8-row blocks

    # conv1 (+ folded BN scale) -> BN shift -> ReLU.  Dropout == id in eval.
    h = jnp.dot(w1_ref[...], im2col(x), preferred_element_type=jnp.float32)
    h = jnp.maximum(h + shift_ref[...], 0.0)

    # conv2 -- second full-depth MXU matmul.
    y = jnp.dot(w2_ref[...], im2col(h), preferred_element_type=jnp.float32)

    # Residual add (MaxPool1d(kernel=stride=1) == identity); single unmasked
    # lane-dense store of the whole (C_out, B*L) result.
    o_ref[...] = (y + x).astype(o_ref.dtype)


def first_block(x, w1, w2, gamma, beta, run_mean, run_var, eps=1e-5):
    """x: (B, C_in, L); w1: (K, C_out, C_in); w2: (K, C_out, C_out)."""
    B, C_in, L = x.shape
    K, C_out, _ = w1.shape
    assert C_out >= C_in and K <= L

    # Fold eval-mode BatchNorm: scale into conv1 weights, keep only the shift.
    inv_std = 1.0 / jnp.sqrt(run_var + eps)
    scale = gamma * inv_std
    shift = (beta - run_mean * scale).reshape(C_out, 1).astype(jnp.float32)

    # Tap-major im2col weight matrices W[o, j*C_out + c] = w[j, o, c]; conv1's
    # input channels are zero-padded to C_out so both convs share one
    # (C_out, K*C_out) @ (K*C_out, B*L) MXU shape.  bf16 operands, f32 accum.
    w1_f = w1.astype(jnp.float32) * scale[None, :, None]
    w1_f = jnp.pad(w1_f, ((0, 0), (0, 0), (0, C_out - C_in)))
    w1_mat = jnp.transpose(w1_f, (1, 0, 2)).reshape(
        C_out, K * C_out).astype(jnp.bfloat16)
    w2_mat = jnp.transpose(w2.astype(jnp.float32), (1, 0, 2)).reshape(
        C_out, K * C_out).astype(jnp.bfloat16)

    # Fold the batch into the lane axis in the wrapper (layout plumbing), so
    # the kernel needs no staging scratch and no partial-sublane stores.
    x2d = jnp.transpose(x, (1, 0, 2)).reshape(C_in, B * L).astype(jnp.float32)

    vmem = pltpu.MemorySpace.VMEM
    kernel = functools.partial(_first_block_kernel, seg_len=L)
    y2d = pl.pallas_call(
        kernel,
        out_shape=jax.ShapeDtypeStruct((C_out, B * L), jnp.float32),
        in_specs=[pl.BlockSpec(memory_space=vmem)] * 4,
        out_specs=pl.BlockSpec(memory_space=vmem),
    )(x2d, w1_mat, w2_mat, shift)

    # Undo the batch fold outside the kernel.
    return y2d.reshape(C_out, B, L).transpose(1, 0, 2).astype(x.dtype)


def ref_forward(x, w1, w2, gamma, beta, run_mean, run_var, eps=1e-5):
    """Pure-JAX reference (lax conv) of FirstBlock eval-mode forward."""
    B, C_in, L = x.shape
    K, C_out, _ = w1.shape
    dn = ("NCW", "OIW", "NCW")
    w1_oiw = jnp.transpose(w1, (1, 2, 0))
    w2_oiw = jnp.transpose(w2, (1, 2, 0))
    h = jax.lax.conv_general_dilated(x, w1_oiw, (1,), [(0, K - 1)],
                                     dimension_numbers=dn)
    inv = 1.0 / jnp.sqrt(run_var + eps)
    h = h * (gamma * inv)[None, :, None] \
        + (beta - run_mean * gamma * inv)[None, :, None]
    h = jnp.maximum(h, 0.0)
    y = jax.lax.conv_general_dilated(h, w2_oiw, (1,), [(0, K - 1)],
                                     dimension_numbers=dn)
    if C_in != C_out:
        skip = jnp.pad(x, ((0, 0), (0, C_out - C_in), (0, 0)))
    else:
        skip = x
    return y + skip


if __name__ == "__main__":
    B, C_in, C_out, K, L = 2, 4, 8, 16, 128

    key = jax.random.PRNGKey(0)
    k1, k2, kx = jax.random.split(key, 3)

    # Deterministic params (PyTorch Conv1d default: U(-1/sqrt(fan_in), +...)).
    b1 = 1.0 / np.sqrt(C_in * K)
    b2 = 1.0 / np.sqrt(C_out * K)
    w1 = jax.random.uniform(k1, (K, C_out, C_in), jnp.float32, -b1, b1)
    w2 = jax.random.uniform(k2, (K, C_out, C_out), jnp.float32, -b2, b2)
    # BatchNorm1d defaults: gamma=1, beta=0, running_mean=0, running_var=1.
    gamma = jnp.ones((C_out,), jnp.float32)
    beta = jnp.zeros((C_out,), jnp.float32)
    run_mean = jnp.zeros((C_out,), jnp.float32)
    run_var = jnp.ones((C_out,), jnp.float32)

    x = jax.random.normal(kx, (B, C_in, L), jnp.float32)

    out = jax.block_until_ready(
        first_block(x, w1, w2, gamma, beta, run_mean, run_var))
    ref = ref_forward(x, w1, w2, gamma, beta, run_mean, run_var)

    assert out.shape == (B, C_out, L)
    # bf16 matmul operands (f32 accumulation): loosened tolerance.
    np.testing.assert_allclose(np.asarray(out), np.asarray(ref),
                               atol=5e-2, rtol=5e-2)
    print("KERNEL_OK")
</pallas_src>

<mosaic_0001>
module attributes {stable_mosaic.version = 11 : i64} {
  func.func @_first_block_kernel(%arg0: memref<4x256xf32, #tpu.memory_space<vmem>>, %arg1: memref<8x128xbf16, #tpu.memory_space<vmem>>, %arg2: memref<8x128xbf16, #tpu.memory_space<vmem>>, %arg3: memref<8x1xf32, #tpu.memory_space<vmem>>, %arg4: memref<8x256xf32, #tpu.memory_space<vmem>>) attributes {dimension_semantics = [], scalar_prefetch = 0 : i64, scratch_operands = 0 : i64, tpu.core_type = #tpu.core_type<tc>} {
    %c0 = arith.constant 0 : index
    %c0_0 = arith.constant 0 : index
    %0 = vector.load %arg0[%c0, %c0_0] : memref<4x256xf32, #tpu.memory_space<vmem>>, vector<4x256xf32>
    %cst = arith.constant 0.000000e+00 : f32
    %1 = vector.broadcast %cst : f32 to vector<4x256xf32>
    %2 = tpu.concatenate %0, %1 in 0 : vector<4x256xf32>, vector<4x256xf32> -> vector<8x256xf32>
    %3 = tpu.iota {dimensions = array<i32: 1>} : vector<8x256xi32>
    %c128_i32 = arith.constant 128 : i32
    %c0_i32 = arith.constant 0 : i32
    %4 = arith.cmpi eq, %c128_i32, %c0_i32 : i32
    %c1_i32 = arith.constant 1 : i32
    %5 = arith.select %4, %c1_i32, %c128_i32 : i32
    %6 = vector.broadcast %5 : i32 to vector<8x256xi32>
    %7 = arith.remsi %3, %6 : vector<8x256xi32>
    %c0_i32_1 = arith.constant 0 : i32
    %8 = vector.broadcast %c0_i32_1 : i32 to vector<8x256xi32>
    %9 = arith.cmpi ne, %7, %8 : vector<8x256xi32>
    %c0_i32_2 = arith.constant 0 : i32
    %10 = vector.broadcast %c0_i32_2 : i32 to vector<8x256xi32>
    %11 = arith.cmpi slt, %7, %10 : vector<8x256xi32>
    %c0_i32_3 = arith.constant 0 : i32
    %12 = arith.cmpi slt, %5, %c0_i32_3 : i32
    %13 = vector.broadcast %12 : i1 to vector<8x256xi1>
    %14 = vector.broadcast %13 : vector<8x256xi1> to vector<8x256xi1>
    %15 = arith.xori %11, %14 : vector<8x256xi1>
    %16 = arith.andi %15, %9 : vector<8x256xi1>
    %17 = vector.broadcast %5 : i32 to vector<8x256xi32>
    %18 = arith.addi %7, %17 : vector<8x256xi32>
    %19 = arith.select %16, %18, %7 : vector<8x256xi1>, vector<8x256xi32>
    %c127_i32 = arith.constant 127 : i32
    %20 = vector.broadcast %c127_i32 : i32 to vector<8x256xi32>
    %21 = arith.cmpi slt, %19, %20 : vector<8x256xi32>
    %22 = arith.extui %21 : vector<8x256xi1> to vector<8x256xi32>
    %23 = arith.sitofp %22 : vector<8x256xi32> to vector<8x256xf32>
    %c126_i32 = arith.constant 126 : i32
    %24 = vector.broadcast %c126_i32 : i32 to vector<8x256xi32>
    %25 = arith.cmpi slt, %19, %24 : vector<8x256xi32>
    %26 = arith.extui %25 : vector<8x256xi1> to vector<8x256xi32>
    %27 = arith.sitofp %26 : vector<8x256xi32> to vector<8x256xf32>
    %c125_i32 = arith.constant 125 : i32
    %28 = vector.broadcast %c125_i32 : i32 to vector<8x256xi32>
    %29 = arith.cmpi slt, %19, %28 : vector<8x256xi32>
    %30 = arith.extui %29 : vector<8x256xi1> to vector<8x256xi32>
    %31 = arith.sitofp %30 : vector<8x256xi32> to vector<8x256xf32>
    %c124_i32 = arith.constant 124 : i32
    %32 = vector.broadcast %c124_i32 : i32 to vector<8x256xi32>
    %33 = arith.cmpi slt, %19, %32 : vector<8x256xi32>
    %34 = arith.extui %33 : vector<8x256xi1> to vector<8x256xi32>
    %35 = arith.sitofp %34 : vector<8x256xi32> to vector<8x256xf32>
    %c123_i32 = arith.constant 123 : i32
    %36 = vector.broadcast %c123_i32 : i32 to vector<8x256xi32>
    %37 = arith.cmpi slt, %19, %36 : vector<8x256xi32>
    %38 = arith.extui %37 : vector<8x256xi1> to vector<8x256xi32>
    %39 = arith.sitofp %38 : vector<8x256xi32> to vector<8x256xf32>
    %c122_i32 = arith.constant 122 : i32
    %40 = vector.broadcast %c122_i32 : i32 to vector<8x256xi32>
    %41 = arith.cmpi slt, %19, %40 : vector<8x256xi32>
    %42 = arith.extui %41 : vector<8x256xi1> to vector<8x256xi32>
    %43 = arith.sitofp %42 : vector<8x256xi32> to vector<8x256xf32>
    %c121_i32 = arith.constant 121 : i32
    %44 = vector.broadcast %c121_i32 : i32 to vector<8x256xi32>
    %45 = arith.cmpi slt, %19, %44 : vector<8x256xi32>
    %46 = arith.extui %45 : vector<8x256xi1> to vector<8x256xi32>
    %47 = arith.sitofp %46 : vector<8x256xi32> to vector<8x256xf32>
    %c120_i32 = arith.constant 120 : i32
    %48 = vector.broadcast %c120_i32 : i32 to vector<8x256xi32>
    %49 = arith.cmpi slt, %19, %48 : vector<8x256xi32>
    %50 = arith.extui %49 : vector<8x256xi1> to vector<8x256xi32>
    %51 = arith.sitofp %50 : vector<8x256xi32> to vector<8x256xf32>
    %c119_i32 = arith.constant 119 : i32
    %52 = vector.broadcast %c119_i32 : i32 to vector<8x256xi32>
    %53 = arith.cmpi slt, %19, %52 : vector<8x256xi32>
    %54 = arith.extui %53 : vector<8x256xi1> to vector<8x256xi32>
    %55 = arith.sitofp %54 : vector<8x256xi32> to vector<8x256xf32>
    %c118_i32 = arith.constant 118 : i32
    %56 = vector.broadcast %c118_i32 : i32 to vector<8x256xi32>
    %57 = arith.cmpi slt, %19, %56 : vector<8x256xi32>
    %58 = arith.extui %57 : vector<8x256xi1> to vector<8x256xi32>
    %59 = arith.sitofp %58 : vector<8x256xi32> to vector<8x256xf32>
    %c117_i32 = arith.constant 117 : i32
    %60 = vector.broadcast %c117_i32 : i32 to vector<8x256xi32>
    %61 = arith.cmpi slt, %19, %60 : vector<8x256xi32>
    %62 = arith.extui %61 : vector<8x256xi1> to vector<8x256xi32>
    %63 = arith.sitofp %62 : vector<8x256xi32> to vector<8x256xf32>
    %c116_i32 = arith.constant 116 : i32
    %64 = vector.broadcast %c116_i32 : i32 to vector<8x256xi32>
    %65 = arith.cmpi slt, %19, %64 : vector<8x256xi32>
    %66 = arith.extui %65 : vector<8x256xi1> to vector<8x256xi32>
    %67 = arith.sitofp %66 : vector<8x256xi32> to vector<8x256xf32>
    %c115_i32 = arith.constant 115 : i32
    %68 = vector.broadcast %c115_i32 : i32 to vector<8x256xi32>
    %69 = arith.cmpi slt, %19, %68 : vector<8x256xi32>
    %70 = arith.extui %69 : vector<8x256xi1> to vector<8x256xi32>
    %71 = arith.sitofp %70 : vector<8x256xi32> to vector<8x256xf32>
    %c114_i32 = arith.constant 114 : i32
    %72 = vector.broadcast %c114_i32 : i32 to vector<8x256xi32>
    %73 = arith.cmpi slt, %19, %72 : vector<8x256xi32>
    %74 = arith.extui %73 : vector<8x256xi1> to vector<8x256xi32>
    %75 = arith.sitofp %74 : vector<8x256xi32> to vector<8x256xf32>
    %c113_i32 = arith.constant 113 : i32
    %76 = vector.broadcast %c113_i32 : i32 to vector<8x256xi32>
    %77 = arith.cmpi slt, %19, %76 : vector<8x256xi32>
    %78 = arith.extui %77 : vector<8x256xi1> to vector<8x256xi32>
    %79 = arith.sitofp %78 : vector<8x256xi32> to vector<8x256xf32>
    %c0_4 = arith.constant 0 : index
    %c0_5 = arith.constant 0 : index
    %80 = vector.load %arg1[%c0_4, %c0_5] : memref<8x128xbf16, #tpu.memory_space<vmem>>, vector<8x128xbf16>
    %81 = arith.truncf %2 : vector<8x256xf32> to vector<8x256xbf16>
    %c255_i32 = arith.constant 255 : i32
    %82 = tpu.dynamic_rotate %2 by %c255_i32 dim 1 : vector<8x256xf32>, i32 -> vector<8x256xf32>
    %83 = arith.mulf %82, %23 : vector<8x256xf32>
    %84 = arith.truncf %83 : vector<8x256xf32> to vector<8x256xbf16>
    %c254_i32 = arith.constant 254 : i32
    %85 = tpu.dynamic_rotate %2 by %c254_i32 dim 1 : vector<8x256xf32>, i32 -> vector<8x256xf32>
    %86 = arith.mulf %85, %27 : vector<8x256xf32>
    %87 = arith.truncf %86 : vector<8x256xf32> to vector<8x256xbf16>
    %c253_i32 = arith.constant 253 : i32
    %88 = tpu.dynamic_rotate %2 by %c253_i32 dim 1 : vector<8x256xf32>, i32 -> vector<8x256xf32>
    %89 = arith.mulf %88, %31 : vector<8x256xf32>
    %90 = arith.truncf %89 : vector<8x256xf32> to vector<8x256xbf16>
    %c252_i32 = arith.constant 252 : i32
    %91 = tpu.dynamic_rotate %2 by %c252_i32 dim 1 : vector<8x256xf32>, i32 -> vector<8x256xf32>
    %92 = arith.mulf %91, %35 : vector<8x256xf32>
    %93 = arith.truncf %92 : vector<8x256xf32> to vector<8x256xbf16>
    %c251_i32 = arith.constant 251 : i32
    %94 = tpu.dynamic_rotate %2 by %c251_i32 dim 1 : vector<8x256xf32>, i32 -> vector<8x256xf32>
    %95 = arith.mulf %94, %39 : vector<8x256xf32>
    %96 = arith.truncf %95 : vector<8x256xf32> to vector<8x256xbf16>
    %c250_i32 = arith.constant 250 : i32
    %97 = tpu.dynamic_rotate %2 by %c250_i32 dim 1 : vector<8x256xf32>, i32 -> vector<8x256xf32>
    %98 = arith.mulf %97, %43 : vector<8x256xf32>
    %99 = arith.truncf %98 : vector<8x256xf32> to vector<8x256xbf16>
    %c249_i32 = arith.constant 249 : i32
    %100 = tpu.dynamic_rotate %2 by %c249_i32 dim 1 : vector<8x256xf32>, i32 -> vector<8x256xf32>
    %101 = arith.mulf %100, %47 : vector<8x256xf32>
    %102 = arith.truncf %101 : vector<8x256xf32> to vector<8x256xbf16>
    %c248_i32 = arith.constant 248 : i32
    %103 = tpu.dynamic_rotate %2 by %c248_i32 dim 1 : vector<8x256xf32>, i32 -> vector<8x256xf32>
    %104 = arith.mulf %103, %51 : vector<8x256xf32>
    %105 = arith.truncf %104 : vector<8x256xf32> to vector<8x256xbf16>
    %c247_i32 = arith.constant 247 : i32
    %106 = tpu.dynamic_rotate %2 by %c247_i32 dim 1 : vector<8x256xf32>, i32 -> vector<8x256xf32>
    %107 = arith.mulf %106, %55 : vector<8x256xf32>
    %108 = arith.truncf %107 : vector<8x256xf32> to vector<8x256xbf16>
    %c246_i32 = arith.constant 246 : i32
    %109 = tpu.dynamic_rotate %2 by %c246_i32 dim 1 : vector<8x256xf32>, i32 -> vector<8x256xf32>
    %110 = arith.mulf %109, %59 : vector<8x256xf32>
    %111 = arith.truncf %110 : vector<8x256xf32> to vector<8x256xbf16>
    %c245_i32 = arith.constant 245 : i32
    %112 = tpu.dynamic_rotate %2 by %c245_i32 dim 1 : vector<8x256xf32>, i32 -> vector<8x256xf32>
    %113 = arith.mulf %112, %63 : vector<8x256xf32>
    %114 = arith.truncf %113 : vector<8x256xf32> to vector<8x256xbf16>
    %c244_i32 = arith.constant 244 : i32
    %115 = tpu.dynamic_rotate %2 by %c244_i32 dim 1 : vector<8x256xf32>, i32 -> vector<8x256xf32>
    %116 = arith.mulf %115, %67 : vector<8x256xf32>
    %117 = arith.truncf %116 : vector<8x256xf32> to vector<8x256xbf16>
    %c243_i32 = arith.constant 243 : i32
    %118 = tpu.dynamic_rotate %2 by %c243_i32 dim 1 : vector<8x256xf32>, i32 -> vector<8x256xf32>
    %119 = arith.mulf %118, %71 : vector<8x256xf32>
    %120 = arith.truncf %119 : vector<8x256xf32> to vector<8x256xbf16>
    %c242_i32 = arith.constant 242 : i32
    %121 = tpu.dynamic_rotate %2 by %c242_i32 dim 1 : vector<8x256xf32>, i32 -> vector<8x256xf32>
    %122 = arith.mulf %121, %75 : vector<8x256xf32>
    %123 = arith.truncf %122 : vector<8x256xf32> to vector<8x256xbf16>
    %c241_i32 = arith.constant 241 : i32
    %124 = tpu.dynamic_rotate %2 by %c241_i32 dim 1 : vector<8x256xf32>, i32 -> vector<8x256xf32>
    %125 = arith.mulf %124, %79 : vector<8x256xf32>
    %126 = arith.truncf %125 : vector<8x256xf32> to vector<8x256xbf16>
    %127 = tpu.concatenate %81, %84, %87, %90, %93, %96, %99, %102, %105, %108, %111, %114, %117, %120, %123, %126 in 0 : vector<8x256xbf16>, vector<8x256xbf16>, vector<8x256xbf16>, vector<8x256xbf16>, vector<8x256xbf16>, vector<8x256xbf16>, vector<8x256xbf16>, vector<8x256xbf16>, vector<8x256xbf16>, vector<8x256xbf16>, vector<8x256xbf16>, vector<8x256xbf16>, vector<8x256xbf16>, vector<8x256xbf16>, vector<8x256xbf16>, vector<8x256xbf16> -> vector<128x256xbf16>
    %cst_6 = arith.constant dense<0.000000e+00> : vector<8x256xf32>
    %128 = tpu.matmul %80, %127, %cst_6 {dimension_numbers = #tpu.dot_dimension_numbers<[1], [0], [0], [1], [0, 0, 1, 1], [], []>} : vector<8x128xbf16>, vector<128x256xbf16>, vector<8x256xf32> -> vector<8x256xf32>
    %c0_7 = arith.constant 0 : index
    %c0_8 = arith.constant 0 : index
    %129 = vector.load %arg3[%c0_7, %c0_8] : memref<8x1xf32, #tpu.memory_space<vmem>>, vector<8x1xf32>
    %130 = vector.broadcast %129 : vector<8x1xf32> to vector<8x256xf32>
    %131 = arith.addf %128, %130 : vector<8x256xf32>
    %cst_9 = arith.constant 0.000000e+00 : f32
    %132 = vector.broadcast %cst_9 : f32 to vector<8x256xf32>
    %133 = arith.maximumf %131, %132 : vector<8x256xf32>
    %c0_10 = arith.constant 0 : index
    %c0_11 = arith.constant 0 : index
    %134 = vector.load %arg2[%c0_10, %c0_11] : memref<8x128xbf16, #tpu.memory_space<vmem>>, vector<8x128xbf16>
    %135 = arith.truncf %133 : vector<8x256xf32> to vector<8x256xbf16>
    %c255_i32_12 = arith.constant 255 : i32
    %136 = tpu.dynamic_rotate %133 by %c255_i32_12 dim 1 : vector<8x256xf32>, i32 -> vector<8x256xf32>
    %137 = arith.mulf %136, %23 : vector<8x256xf32>
    %138 = arith.truncf %137 : vector<8x256xf32> to vector<8x256xbf16>
    %c254_i32_13 = arith.constant 254 : i32
    %139 = tpu.dynamic_rotate %133 by %c254_i32_13 dim 1 : vector<8x256xf32>, i32 -> vector<8x256xf32>
    %140 = arith.mulf %139, %27 : vector<8x256xf32>
    %141 = arith.truncf %140 : vector<8x256xf32> to vector<8x256xbf16>
    %c253_i32_14 = arith.constant 253 : i32
    %142 = tpu.dynamic_rotate %133 by %c253_i32_14 dim 1 : vector<8x256xf32>, i32 -> vector<8x256xf32>
    %143 = arith.mulf %142, %31 : vector<8x256xf32>
    %144 = arith.truncf %143 : vector<8x256xf32> to vector<8x256xbf16>
    %c252_i32_15 = arith.constant 252 : i32
    %145 = tpu.dynamic_rotate %133 by %c252_i32_15 dim 1 : vector<8x256xf32>, i32 -> vector<8x256xf32>
    %146 = arith.mulf %145, %35 : vector<8x256xf32>
    %147 = arith.truncf %146 : vector<8x256xf32> to vector<8x256xbf16>
    %c251_i32_16 = arith.constant 251 : i32
    %148 = tpu.dynamic_rotate %133 by %c251_i32_16 dim 1 : vector<8x256xf32>, i32 -> vector<8x256xf32>
    %149 = arith.mulf %148, %39 : vector<8x256xf32>
    %150 = arith.truncf %149 : vector<8x256xf32> to vector<8x256xbf16>
    %c250_i32_17 = arith.constant 250 : i32
    %151 = tpu.dynamic_rotate %133 by %c250_i32_17 dim 1 : vector<8x256xf32>, i32 -> vector<8x256xf32>
    %152 = arith.mulf %151, %43 : vector<8x256xf32>
    %153 = arith.truncf %152 : vector<8x256xf32> to vector<8x256xbf16>
    %c249_i32_18 = arith.constant 249 : i32
    %154 = tpu.dynamic_rotate %133 by %c249_i32_18 dim 1 : vector<8x256xf32>, i32 -> vector<8x256xf32>
    %155 = arith.mulf %154, %47 : vector<8x256xf32>
    %156 = arith.truncf %155 : vector<8x256xf32> to vector<8x256xbf16>
    %c248_i32_19 = arith.constant 248 : i32
    %157 = tpu.dynamic_rotate %133 by %c248_i32_19 dim 1 : vector<8x256xf32>, i32 -> vector<8x256xf32>
    %158 = arith.mulf %157, %51 : vector<8x256xf32>
    %159 = arith.truncf %158 : vector<8x256xf32> to vector<8x256xbf16>
    %c247_i32_20 = arith.constant 247 : i32
    %160 = tpu.dynamic_rotate %133 by %c247_i32_20 dim 1 : vector<8x256xf32>, i32 -> vector<8x256xf32>
    %161 = arith.mulf %160, %55 : vector<8x256xf32>
    %162 = arith.truncf %161 : vector<8x256xf32> to vector<8x256xbf16>
    %c246_i32_21 = arith.constant 246 : i32
    %163 = tpu.dynamic_rotate %133 by %c246_i32_21 dim 1 : vector<8x256xf32>, i32 -> vector<8x256xf32>
    %164 = arith.mulf %163, %59 : vector<8x256xf32>
    %165 = arith.truncf %164 : vector<8x256xf32> to vector<8x256xbf16>
    %c245_i32_22 = arith.constant 245 : i32
    %166 = tpu.dynamic_rotate %133 by %c245_i32_22 dim 1 : vector<8x256xf32>, i32 -> vector<8x256xf32>
    %167 = arith.mulf %166, %63 : vector<8x256xf32>
    %168 = arith.truncf %167 : vector<8x256xf32> to vector<8x256xbf16>
    %c244_i32_23 = arith.constant 244 : i32
    %169 = tpu.dynamic_rotate %133 by %c244_i32_23 dim 1 : vector<8x256xf32>, i32 -> vector<8x256xf32>
    %170 = arith.mulf %169, %67 : vector<8x256xf32>
    %171 = arith.truncf %170 : vector<8x256xf32> to vector<8x256xbf16>
    %c243_i32_24 = arith.constant 243 : i32
    %172 = tpu.dynamic_rotate %133 by %c243_i32_24 dim 1 : vector<8x256xf32>, i32 -> vector<8x256xf32>
    %173 = arith.mulf %172, %71 : vector<8x256xf32>
    %174 = arith.truncf %173 : vector<8x256xf32> to vector<8x256xbf16>
    %c242_i32_25 = arith.constant 242 : i32
    %175 = tpu.dynamic_rotate %133 by %c242_i32_25 dim 1 : vector<8x256xf32>, i32 -> vector<8x256xf32>
    %176 = arith.mulf %175, %75 : vector<8x256xf32>
    %177 = arith.truncf %176 : vector<8x256xf32> to vector<8x256xbf16>
    %c241_i32_26 = arith.constant 241 : i32
    %178 = tpu.dynamic_rotate %133 by %c241_i32_26 dim 1 : vector<8x256xf32>, i32 -> vector<8x256xf32>
    %179 = arith.mulf %178, %79 : vector<8x256xf32>
    %180 = arith.truncf %179 : vector<8x256xf32> to vector<8x256xbf16>
    %181 = tpu.concatenate %135, %138, %141, %144, %147, %150, %153, %156, %159, %162, %165, %168, %171, %174, %177, %180 in 0 : vector<8x256xbf16>, vector<8x256xbf16>, vector<8x256xbf16>, vector<8x256xbf16>, vector<8x256xbf16>, vector<8x256xbf16>, vector<8x256xbf16>, vector<8x256xbf16>, vector<8x256xbf16>, vector<8x256xbf16>, vector<8x256xbf16>, vector<8x256xbf16>, vector<8x256xbf16>, vector<8x256xbf16>, vector<8x256xbf16>, vector<8x256xbf16> -> vector<128x256xbf16>
    %cst_27 = arith.constant dense<0.000000e+00> : vector<8x256xf32>
    %182 = tpu.matmul %134, %181, %cst_27 {dimension_numbers = #tpu.dot_dimension_numbers<[1], [0], [0], [1], [0, 0, 1, 1], [], []>} : vector<8x128xbf16>, vector<128x256xbf16>, vector<8x256xf32> -> vector<8x256xf32>
    %183 = arith.addf %182, %2 : vector<8x256xf32>
    %c0_28 = arith.constant 0 : index
    %c0_29 = arith.constant 0 : index
    %184 = vector.load %arg4[%c0_28, %c0_29] : memref<8x256xf32, #tpu.memory_space<vmem>>, vector<8x256xf32>
    tpu.vector_store %arg4[%c0_28, %c0_29], %183 {strides = array<i32>} : memref<8x256xf32, #tpu.memory_space<vmem>>, vector<8x256xf32>,
    return
  }
}

</mosaic_0001>

<llo_original>
// kernel: tpu_custom_call.1
$region0: #{tpu_custom_call.1}
  #allocation0 [shape = 'u32[]', space=smem, size = 0x4, offset = 0x4, fixed_abs, tag = 'smem constant byte address 0x4 - core index']
  #allocation1 [shape = 'u32[72,128]{1,0:T(1,128)}', space=vmem, size = 0x9000, scoped, tag = 'internal scratch']
  %s0 = inlined_call_operand.vmem [shape: f32[4,256], index: 0, kind: input, shape index: {}]
  %s1 = inlined_call_operand.hbm [shape: bf16[8,128], index: 1, kind: input, shape index: {}]
  %s2 = inlined_call_operand.hbm [shape: bf16[8,128], index: 2, kind: input, shape index: {}]
  %s3 = inlined_call_operand.vmem [shape: f32[8,1], index: 3, kind: input, shape index: {}]
  %s4 = inlined_call_operand.hbm [shape: f32[8,256], index: 4, kind: output, shape index: {}]
  %s5 = sld [smem:[#allocation0]]
  $region34: #{tpu_custom_call.1} parent=0
    _
  %s7 = ssub.s32 1, %s5
  %s8 = scalar_select 0, %s7, %s5
  $region1: #{tpu_custom_call.1} parent=0
    #allocation2 [shape = 'u8[2048]{0}', space=vmem, size = 0x800, scoped, tag = 'input window, operand 1, single buffered']
    #allocation3 [shape = 's32[1]{0}', space=sflag, size = 0x4, scoped, tag = 'scoped memory for tpu_custom_call.1']
    #allocation4 [shape = 's32[1]{0}', space=sflag, size = 0x4, scoped, tag = 'scoped memory for tpu_custom_call.1']
    #allocation5 [shape = 'u8[2048]{0}', space=vmem, size = 0x800, scoped, tag = 'input window, operand 2, single buffered']
    #allocation6 [shape = 's32[1]{0}', space=sflag, size = 0x4, scoped, tag = 'scoped memory for tpu_custom_call.1']
    #allocation7 [shape = 'u8[8192]{0}', space=vmem, size = 0x2000, scoped, tag = 'output window, operand 0, single buffered']
    %9 = vsyncpa [#allocation3], 0
    %10 = vsyncpa [#allocation6], 0
    %11 = vsyncpa [#allocation4], 0
    // Predicated region
    $region2: #{tpu_custom_call.1} parent=1 // pred_check
      _
    $region3: #{tpu_custom_call.1} parent=1 // pred_check_branch
      %13 = sbr.rel (0) target = $region5
    $region4: #{tpu_custom_call.1} parent=1 // pred_region
      _
    $region5: #{tpu_custom_call.1} parent=1 // pred_fallthru
      _
    // Predicated region
    $region6: #{tpu_custom_call.1} parent=1 // pred_check
      _
    $region7: #{tpu_custom_call.1} parent=1 // pred_check_branch
      %15 = sbr.rel (0) target = $region9
    $region8: #{tpu_custom_call.1} parent=1 // pred_region
      %17 = vsyncadd [#allocation3], 0
      %s19 = sshll.u32 %s1, 4
      %s20 = int_to_ptr.hbm [resolvable:$true] %s19
      %s21 = sshll.u32 [#allocation2], 4
      %s22 = int_to_ptr.vmem [resolvable:$true] %s21
      %24 = dma.hbm_to_vmem [thread:$0]  %s20, 64, %s22, [#allocation3]
    $region9: #{tpu_custom_call.1} parent=1 // pred_fallthru
      _
    // Predicated region
    $region10: #{tpu_custom_call.1} parent=1 // pred_check
      _
    $region11: #{tpu_custom_call.1} parent=1 // pred_check_branch
      %26 = sbr.rel (0) target = $region13
    $region12: #{tpu_custom_call.1} parent=1 // pred_region
      %28 = vsyncadd [#allocation6], 0
      %s30 = sshll.u32 %s2, 4
      %s31 = int_to_ptr.hbm [resolvable:$true] %s30
      %s32 = sshll.u32 [#allocation5], 4
      %s33 = int_to_ptr.vmem [resolvable:$true] %s32
      %35 = dma.hbm_to_vmem [thread:$0]  %s31, 64, %s33, [#allocation6]
    $region13: #{tpu_custom_call.1} parent=1 // pred_fallthru
      _
    // Predicated region
    $region14: #{tpu_custom_call.1} parent=1 // pred_check
      _
    $region15: #{tpu_custom_call.1} parent=1 // pred_check_branch
      %37 = sbr.rel (0) target = $region17
    $region16: #{tpu_custom_call.1} parent=1 // pred_region
      _
    $region17: #{tpu_custom_call.1} parent=1 // pred_fallthru
      _
    // Predicated region
    $region18: #{tpu_custom_call.1} parent=1 // pred_check
      _
    $region19: #{tpu_custom_call.1} parent=1 // pred_check_branch
      %39 = sbr.rel (0) target = $region21
    $region20: #{tpu_custom_call.1} parent=1 // pred_region
      %41 = dma.done [#allocation3], 64
    $region21: #{tpu_custom_call.1} parent=1 // pred_fallthru
      _
    // Predicated region
    $region22: #{tpu_custom_call.1} parent=1 // pred_check
      _
    $region23: #{tpu_custom_call.1} parent=1 // pred_check_branch
      %43 = sbr.rel (0) target = $region25
    $region24: #{tpu_custom_call.1} parent=1 // pred_region
      %45 = dma.done [#allocation6], 64
    $region25: #{tpu_custom_call.1} parent=1 // pred_fallthru
      _
    %v46 = vld [vmem:[%s0] sm:$0xff]
    %48 = vst [vmem:[#allocation1] ss:$2 sm:$0xff] %v46
    %v49 = vld.sshfl [vmem:[#allocation1] sm:$0xff pattern:$0x75316420]
    %v50 = vld.sshfl [vmem:[#allocation1 + $0x8] sm:$0xff pattern:$0x75316420]
    %vm53 = vcmask 1043456
    %v54 = vsel %vm53, %v49, 0.0
    %v55 = vsel %vm53, %v50, 0.0
    %v56 = vlaneseq
    %v57 = vand.u32 %v56, 127
    %v58 = vadd.s32 %v57, 128
    %vm59 = vcmp.lt.s32.totalorder %v57, 0
    %v60 = vsub.s32 0, %v57
    %v61 = vsel %vm59, %v60, %v57
    %v62 = vshrl.u32 %v61, 7
    %v63 = vand.u32 %v61, 127
    %v64 = vsub.s32 0, %v63
    %v65 = vsel %vm59, %v64, %v63
    %vm66 = vcmp.lt.s32.totalorder %v58, 0
    %v67 = vsub.s32 0, %v58
    %v68 = vsel %vm66, %v67, %v58
    %v69 = vshrl.u32 %v68, 7
    %v70 = vand.u32 %v68, 127
    %v71 = vsub.s32 0, %v70
    %v72 = vsel %vm66, %v71, %v70
    %vm73 = vcmp.ne.s32.totalorder %v65, 0
    %vm74 = vcmp.ne.s32.totalorder %v72, 0
    %vm75 = vcmp.lt.s32.totalorder %v65, 0
    %vm76 = vcmp.lt.s32.totalorder %v72, 0
    %vm77 = vmand %vm75, %vm73
    %vm78 = vmand %vm76, %vm74
    %v79 = vadd.s32 %v65, 128
    %v80 = vadd.s32 %v72, 128
    %v81 = vsel %vm77, %v79, %v65
    %v82 = vsel %vm78, %v80, %v72
    %vm83 = vcmp.lt.s32.totalorder %v81, 127
    %vm84 = vcmp.lt.s32.totalorder %v82, 127
    %v85 = vsel %vm83, 1, 0
    %v86 = vsel %vm84, 1, 0
    %v87 = vcvt.s32.f32 %v85
    %v88 = vcvt.s32.f32 %v86
    %vm89 = vcmp.lt.s32.totalorder %v81, 126
    %vm90 = vcmp.lt.s32.totalorder %v82, 126
    %v91 = vsel %vm89, 1, 0
    %v92 = vsel %vm90, 1, 0
    %v93 = vcvt.s32.f32 %v91
    %v94 = vcvt.s32.f32 %v92
    %vm95 = vcmp.lt.s32.totalorder %v81, 125
    %vm96 = vcmp.lt.s32.totalorder %v82, 125
    %v97 = vsel %vm95, 1, 0
    %v98 = vsel %vm96, 1, 0
    %v99 = vcvt.s32.f32 %v97
    %v100 = vcvt.s32.f32 %v98
    %vm101 = vcmp.lt.s32.totalorder %v81, 124
    %vm102 = vcmp.lt.s32.totalorder %v82, 124
    %v103 = vsel %vm101, 1, 0
    %v104 = vsel %vm102, 1, 0
    %v105 = vcvt.s32.f32 %v103
    %v106 = vcvt.s32.f32 %v104
    %vm107 = vcmp.lt.s32.totalorder %v81, 123
    %vm108 = vcmp.lt.s32.totalorder %v82, 123
    %v109 = vsel %vm107, 1, 0
    %v110 = vsel %vm108, 1, 0
    %v111 = vcvt.s32.f32 %v109
    %v112 = vcvt.s32.f32 %v110
    %vm113 = vcmp.lt.s32.totalorder %v81, 122
    %vm114 = vcmp.lt.s32.totalorder %v82, 122
    %v115 = vsel %vm113, 1, 0
    %v116 = vsel %vm114, 1, 0
    %v117 = vcvt.s32.f32 %v115
    %v118 = vcvt.s32.f32 %v116
    %vm119 = vcmp.lt.s32.totalorder %v81, 121
    %vm120 = vcmp.lt.s32.totalorder %v82, 121
    %v121 = vsel %vm119, 1, 0
    %v122 = vsel %vm120, 1, 0
    %v123 = vcvt.s32.f32 %v121
    %v124 = vcvt.s32.f32 %v122
    %vm125 = vcmp.lt.s32.totalorder %v81, 120
    %vm126 = vcmp.lt.s32.totalorder %v82, 120
    %v127 = vsel %vm125, 1, 0
    %v128 = vsel %vm126, 1, 0
    %v129 = vcvt.s32.f32 %v127
    %v130 = vcvt.s32.f32 %v128
    %vm131 = vcmp.lt.s32.totalorder %v81, 119
    %vm132 = vcmp.lt.s32.totalorder %v82, 119
    %v133 = vsel %vm131, 1, 0
    %v134 = vsel %vm132, 1, 0
    %v135 = vcvt.s32.f32 %v133
    %v136 = vcvt.s32.f32 %v134
    %vm137 = vcmp.lt.s32.totalorder %v81, 118
    %vm138 = vcmp.lt.s32.totalorder %v82, 118
    %v139 = vsel %vm137, 1, 0
    %v140 = vsel %vm138, 1, 0
    %v141 = vcvt.s32.f32 %v139
    %v142 = vcvt.s32.f32 %v140
    %vm143 = vcmp.lt.s32.totalorder %v81, 117
    %vm144 = vcmp.lt.s32.totalorder %v82, 117
    %v145 = vsel %vm143, 1, 0
    %v146 = vsel %vm144, 1, 0
    %v147 = vcvt.s32.f32 %v145
    %v148 = vcvt.s32.f32 %v146
    %vm149 = vcmp.lt.s32.totalorder %v81, 116
    %vm150 = vcmp.lt.s32.totalorder %v82, 116
    %v151 = vsel %vm149, 1, 0
    %v152 = vsel %vm150, 1, 0
    %v153 = vcvt.s32.f32 %v151
    %v154 = vcvt.s32.f32 %v152
    %vm155 = vcmp.lt.s32.totalorder %v81, 115
    %vm156 = vcmp.lt.s32.totalorder %v82, 115
    %v157 = vsel %vm155, 1, 0
    %v158 = vsel %vm156, 1, 0
    %v159 = vcvt.s32.f32 %v157
    %v160 = vcvt.s32.f32 %v158
    %vm161 = vcmp.lt.s32.totalorder %v81, 114
    %vm162 = vcmp.lt.s32.totalorder %v82, 114
    %v163 = vsel %vm161, 1, 0
    %v164 = vsel %vm162, 1, 0
    %v165 = vcvt.s32.f32 %v163
    %v166 = vcvt.s32.f32 %v164
    %vm167 = vcmp.lt.s32.totalorder %v81, 113
    %vm168 = vcmp.lt.s32.totalorder %v82, 113
    %v169 = vsel %vm167, 1, 0
    %v170 = vsel %vm168, 1, 0
    %v171 = vcvt.s32.f32 %v169
    %v172 = vcvt.s32.f32 %v170
    %v173 = vld [vmem:[#allocation2] sm:$0xf]
    %v174 = vpack.c.bf16 %v55, %v54
    %175 = vrot.lane.b32.xlu0 %v54, 127
    %v176 = vpop.permute.xlu0 %175
    %177 = vrot.lane.b32.xlu0 %v55, 127
    %v178 = vpop.permute.xlu0 %177
    %vm179 = vcmp.lt.s32.totalorder %v57, 127
    %v180 = vsel %vm179, %v176, %v178
    %v181 = vsel %vm179, %v178, %v176
    %v182 = vmul.f32 %v180, %v87
    %v183 = vmul.f32 %v181, %v88
    %v184 = vpack.c.bf16 %v183, %v182
    %185 = vrot.lane.b32.xlu0 %v54, 126
    %v186 = vpop.permute.xlu0 %185
    %187 = vrot.lane.b32.xlu0 %v55, 126
    %v188 = vpop.permute.xlu0 %187
    %vm189 = vcmp.lt.s32.totalorder %v57, 126
    %v190 = vsel %vm189, %v186, %v188
    %v191 = vsel %vm189, %v188, %v186
    %v192 = vmul.f32 %v190, %v93
    %v193 = vmul.f32 %v191, %v94
    %v194 = vpack.c.bf16 %v193, %v192
    %195 = vrot.lane.b32.xlu0 %v54, 125
    %v196 = vpop.permute.xlu0 %195
    %197 = vrot.lane.b32.xlu0 %v55, 125
    %v198 = vpop.permute.xlu0 %197
    %vm199 = vcmp.lt.s32.totalorder %v57, 125
    %v200 = vsel %vm199, %v196, %v198
    %v201 = vsel %vm199, %v198, %v196
    %v202 = vmul.f32 %v200, %v99
    %v203 = vmul.f32 %v201, %v100
    %v204 = vpack.c.bf16 %v203, %v202
    %205 = vrot.lane.b32.xlu0 %v54, 124
    %v206 = vpop.permute.xlu0 %205
    %207 = vrot.lane.b32.xlu0 %v55, 124
    %v208 = vpop.permute.xlu0 %207
    %vm209 = vcmp.lt.s32.totalorder %v57, 124
    %v210 = vsel %vm209, %v206, %v208
    %v211 = vsel %vm209, %v208, %v206
    %v212 = vmul.f32 %v210, %v105
    %v213 = vmul.f32 %v211, %v106
    %v214 = vpack.c.bf16 %v213, %v212
    %215 = vrot.lane.b32.xlu0 %v54, 123
    %v216 = vpop.permute.xlu0 %215
    %217 = vrot.lane.b32.xlu0 %v55, 123
    %v218 = vpop.permute.xlu0 %217
    %vm219 = vcmp.lt.s32.totalorder %v57, 123
    %v220 = vsel %vm219, %v216, %v218
    %v221 = vsel %vm219, %v218, %v216
    %v222 = vmul.f32 %v220, %v111
    %v223 = vmul.f32 %v221, %v112
    %v224 = vpack.c.bf16 %v223, %v222
    %225 = vrot.lane.b32.xlu0 %v54, 122
    %v226 = vpop.permute.xlu0 %225
    %227 = vrot.lane.b32.xlu0 %v55, 122
    %v228 = vpop.permute.xlu0 %227
    %vm229 = vcmp.lt.s32.totalorder %v57, 122
    %v230 = vsel %vm229, %v226, %v228
    %v231 = vsel %vm229, %v228, %v226
    %v232 = vmul.f32 %v230, %v117
    %v233 = vmul.f32 %v231, %v118
    %v234 = vpack.c.bf16 %v233, %v232
    %235 = vrot.lane.b32.xlu0 %v54, 121
    %v236 = vpop.permute.xlu0 %235
    %237 = vrot.lane.b32.xlu0 %v55, 121
    %v238 = vpop.permute.xlu0 %237
    %vm239 = vcmp.lt.s32.totalorder %v57, 121
    %v240 = vsel %vm239, %v236, %v238
    %v241 = vsel %vm239, %v238, %v236
    %v242 = vmul.f32 %v240, %v123
    %v243 = vmul.f32 %v241, %v124
    %v244 = vpack.c.bf16 %v243, %v242
    %245 = vrot.lane.b32.xlu0 %v54, 120
    %v246 = vpop.permute.xlu0 %245
    %247 = vrot.lane.b32.xlu0 %v55, 120
    %v248 = vpop.permute.xlu0 %247
    %vm249 = vcmp.lt.s32.totalorder %v57, 120
    %v250 = vsel %vm249, %v246, %v248
    %v251 = vsel %vm249, %v248, %v246
    %v252 = vmul.f32 %v250, %v129
    %v253 = vmul.f32 %v251, %v130
    %v254 = vpack.c.bf16 %v253, %v252
    %255 = vrot.lane.b32.xlu0 %v54, 119
    %v256 = vpop.permute.xlu0 %255
    %257 = vrot.lane.b32.xlu0 %v55, 119
    %v258 = vpop.permute.xlu0 %257
    %vm259 = vcmp.lt.s32.totalorder %v57, 119
    %v260 = vsel %vm259, %v256, %v258
    %v261 = vsel %vm259, %v258, %v256
    %v262 = vmul.f32 %v260, %v135
    %v263 = vmul.f32 %v261, %v136
    %v264 = vpack.c.bf16 %v263, %v262
    %265 = vrot.lane.b32.xlu0 %v54, 118
    %v266 = vpop.permute.xlu0 %265
    %267 = vrot.lane.b32.xlu0 %v55, 118
    %v268 = vpop.permute.xlu0 %267
    %vm269 = vcmp.lt.s32.totalorder %v57, 118
    %v270 = vsel %vm269, %v266, %v268
    %v271 = vsel %vm269, %v268, %v266
    %v272 = vmul.f32 %v270, %v141
    %v273 = vmul.f32 %v271, %v142
    %v274 = vpack.c.bf16 %v273, %v272
    %275 = vrot.lane.b32.xlu0 %v54, 117
    %v276 = vpop.permute.xlu0 %275
    %277 = vrot.lane.b32.xlu0 %v55, 117
    %v278 = vpop.permute.xlu0 %277
    %vm279 = vcmp.lt.s32.totalorder %v57, 117
    %v280 = vsel %vm279, %v276, %v278
    %v281 = vsel %vm279, %v278, %v276
    %v282 = vmul.f32 %v280, %v147
    %v283 = vmul.f32 %v281, %v148
    %v284 = vpack.c.bf16 %v283, %v282
    %285 = vrot.lane.b32.xlu0 %v54, 116
    %v286 = vpop.permute.xlu0 %285
    %287 = vrot.lane.b32.xlu0 %v55, 116
    %v288 = vpop.permute.xlu0 %287
    %vm289 = vcmp.lt.s32.totalorder %v57, 116
    %v290 = vsel %vm289, %v286, %v288
    %v291 = vsel %vm289, %v288, %v286
    %v292 = vmul.f32 %v290, %v153
    %v293 = vmul.f32 %v291, %v154
    %v294 = vpack.c.bf16 %v293, %v292
    %295 = vrot.lane.b32.xlu0 %v54, 115
    %v296 = vpop.permute.xlu0 %295
    %297 = vrot.lane.b32.xlu0 %v55, 115
    %v298 = vpop.permute.xlu0 %297
    %vm299 = vcmp.lt.s32.totalorder %v57, 115
    %v300 = vsel %vm299, %v296, %v298
    %v301 = vsel %vm299, %v298, %v296
    %v302 = vmul.f32 %v300, %v159
    %v303 = vmul.f32 %v301, %v160
    %v304 = vpack.c.bf16 %v303, %v302
    %305 = vrot.lane.b32.xlu0 %v54, 114
    %v306 = vpop.permute.xlu0 %305
    %307 = vrot.lane.b32.xlu0 %v55, 114
    %v308 = vpop.permute.xlu0 %307
    %vm309 = vcmp.lt.s32.totalorder %v57, 114
    %v310 = vsel %vm309, %v306, %v308
    %v311 = vsel %vm309, %v308, %v306
    %v312 = vmul.f32 %v310, %v165
    %v313 = vmul.f32 %v311, %v166
    %v314 = vpack.c.bf16 %v313, %v312
    %315 = vrot.lane.b32.xlu0 %v54, 113
    %v316 = vpop.permute.xlu0 %315
    %317 = vrot.lane.b32.xlu0 %v55, 113
    %v318 = vpop.permute.xlu0 %317
    %vm319 = vcmp.lt.s32.totalorder %v57, 113
    %v320 = vsel %vm319, %v316, %v318
    %v321 = vsel %vm319, %v318, %v316
    %v322 = vmul.f32 %v320, %v171
    %v323 = vmul.f32 %v321, %v172
    %v324 = vpack.c.bf16 %v323, %v322
    %v326 = vunpack.c.l.b16 %v174
    %v327 = vunpack.c.h.b16 %v174
    %v328 = vpack.c.b16 %v326, %v326
    %v329 = vpack.c.b16 %v327, %v327
    %v331 = vunpack.c.l.b16 %v184
    %v332 = vunpack.c.h.b16 %v184
    %v333 = vpack.c.b16 %v331, %v331
    %v334 = vpack.c.b16 %v332, %v332
    %v336 = vunpack.c.l.b16 %v194
    %v337 = vunpack.c.h.b16 %v194
    %v338 = vpack.c.b16 %v336, %v336
    %v339 = vpack.c.b16 %v337, %v337
    %v341 = vunpack.c.l.b16 %v204
    %v342 = vunpack.c.h.b16 %v204
    %v343 = vpack.c.b16 %v341, %v341
    %v344 = vpack.c.b16 %v342, %v342
    %v346 = vunpack.c.l.b16 %v214
    %v347 = vunpack.c.h.b16 %v214
    %v348 = vpack.c.b16 %v346, %v346
    %v349 = vpack.c.b16 %v347, %v347
    %v351 = vunpack.c.l.b16 %v224
    %v352 = vunpack.c.h.b16 %v224
    %v353 = vpack.c.b16 %v351, %v351
    %v354 = vpack.c.b16 %v352, %v352
    %v356 = vunpack.c.l.b16 %v234
    %v357 = vunpack.c.h.b16 %v234
    %v358 = vpack.c.b16 %v356, %v356
    %v359 = vpack.c.b16 %v357, %v357
    %v361 = vunpack.c.l.b16 %v244
    %v362 = vunpack.c.h.b16 %v244
    %v363 = vpack.c.b16 %v361, %v361
    %v364 = vpack.c.b16 %v362, %v362
    %v366 = vunpack.c.l.b16 %v254
    %v367 = vunpack.c.h.b16 %v254
    %v368 = vpack.c.b16 %v366, %v366
    %v369 = vpack.c.b16 %v367, %v367
    %v371 = vunpack.c.l.b16 %v264
    %v372 = vunpack.c.h.b16 %v264
    %v373 = vpack.c.b16 %v371, %v371
    %v374 = vpack.c.b16 %v372, %v372
    %v376 = vunpack.c.l.b16 %v274
    %v377 = vunpack.c.h.b16 %v274
    %v378 = vpack.c.b16 %v376, %v376
    %v379 = vpack.c.b16 %v377, %v377
    %v381 = vunpack.c.l.b16 %v284
    %v382 = vunpack.c.h.b16 %v284
    %v383 = vpack.c.b16 %v381, %v381
    %v384 = vpack.c.b16 %v382, %v382
    %v386 = vunpack.c.l.b16 %v294
    %v387 = vunpack.c.h.b16 %v294
    %v388 = vpack.c.b16 %v386, %v386
    %v389 = vpack.c.b16 %v387, %v387
    %v391 = vunpack.c.l.b16 %v304
    %v392 = vunpack.c.h.b16 %v304
    %v393 = vpack.c.b16 %v391, %v391
    %v394 = vpack.c.b16 %v392, %v392
    %v396 = vunpack.c.l.b16 %v314
    %v397 = vunpack.c.h.b16 %v314
    %v398 = vpack.c.b16 %v396, %v396
    %v399 = vpack.c.b16 %v397, %v397
    %v401 = vunpack.c.l.b16 %v324
    %v402 = vunpack.c.h.b16 %v324
    %v403 = vpack.c.b16 %v401, %v401
    %v404 = vpack.c.b16 %v402, %v402
    %v407 = vsel %vm53, %v328, %v333
    %v411 = vsel %vm53, %v329, %v334
    %v415 = vsel %vm53, %v338, %v343
    %v419 = vsel %vm53, %v339, %v344
    %v423 = vsel %vm53, %v348, %v353
    %v427 = vsel %vm53, %v349, %v354
    %v431 = vsel %vm53, %v358, %v363
    %v435 = vsel %vm53, %v359, %v364
    %v439 = vsel %vm53, %v368, %v373
    %v443 = vsel %vm53, %v369, %v374
    %v447 = vsel %vm53, %v378, %v383
    %v451 = vsel %vm53, %v379, %v384
    %v455 = vsel %vm53, %v388, %v393
    %v459 = vsel %vm53, %v389, %v394
    %v463 = vsel %vm53, %v398, %v403
    %v467 = vsel %vm53, %v399, %v404
    %v469 = vld [vmem:[%s3] sm:$0xff]
    %471 = vset.pattern.permute.xlu0 0
    %472 = vperm.xlu0 %471, %v469
    %v473 = vpop.permute.xlu0 %472
    %475 = vmatpush.bf16.msra.mxu0 %v463
    %476 = vmatpush.bf16.msra.mxu0 %v455
    %477 = vmatpush.bf16.msra.mxu0 %v447
    %478 = vmatpush.bf16.msra.mxu0 %v439
    %479 = vmatpush.bf16.msra.mxu0 %v431
    %480 = vmatpush.bf16.msra.mxu0 %v423
    %481 = vmatpush.bf16.msra.mxu0 %v415
    %482 = vmatpush.bf16.msra.mxu0 %v407
    %483 = vmatmul.bf16.gmra.mxu0 %v173
    %v484 = vpop.f32.mrf.mxu0
    %v485 = vadd.f32 %v473, %v484
    %v486 = vpop.f32.mrf.mxu0
    %487 = vdwg.mxu0
    %488 = vmatpush.bf16.msra.mxu0 %v467
    %489 = vmatpush.bf16.msra.mxu0 %v459
    %490 = vmatpush.bf16.msra.mxu0 %v451
    %491 = vmatpush.bf16.msra.mxu0 %v443
    %492 = vmatpush.bf16.msra.mxu0 %v435
    %493 = vmatpush.bf16.msra.mxu0 %v427
    %494 = vmatpush.bf16.msra.mxu0 %v419
    %495 = vmatpush.bf16.msra.mxu0 %v411
    %496 = vmatmul.bf16.gmra.mxu0 %v173
    %v497 = vpop.f32.mrf.mxu0
    %v498 = vadd.f32 %v473, %v497
    %v499 = vpop.f32.mrf.mxu0
    %500 = vdwg.mxu0
    %v501 = vmax.f32 %v485, 0.0
    %v502 = vmax.f32 %v498, 0.0
    %v503 = vld [vmem:[#allocation5] sm:$0xf]
    %v504 = vpack.c.bf16 %v502, %v501
    %505 = vrot.lane.b32.xlu0 %v501, 127
    %v506 = vpop.permute.xlu0 %505
    %507 = vrot.lane.b32.xlu0 %v502, 127
    %v508 = vpop.permute.xlu0 %507
    %v509 = vsel %vm179, %v506, %v508
    %v510 = vsel %vm179, %v508, %v506
    %v511 = vmul.f32 %v509, %v87
    %v512 = vmul.f32 %v510, %v88
    %v513 = vpack.c.bf16 %v512, %v511
    %514 = vrot.lane.b32.xlu0 %v501, 126
    %v515 = vpop.permute.xlu0 %514
    %516 = vrot.lane.b32.xlu0 %v502, 126
    %v517 = vpop.permute.xlu0 %516
    %v518 = vsel %vm189, %v515, %v517
    %v519 = vsel %vm189, %v517, %v515
    %v520 = vmul.f32 %v518, %v93
    %v521 = vmul.f32 %v519, %v94
    %v522 = vpack.c.bf16 %v521, %v520
    %523 = vrot.lane.b32.xlu0 %v501, 125
    %v524 = vpop.permute.xlu0 %523
    %525 = vrot.lane.b32.xlu0 %v502, 125
    %v526 = vpop.permute.xlu0 %525
    %v527 = vsel %vm199, %v524, %v526
    %v528 = vsel %vm199, %v526, %v524
    %v529 = vmul.f32 %v527, %v99
    %v530 = vmul.f32 %v528, %v100
    %v531 = vpack.c.bf16 %v530, %v529
    %532 = vrot.lane.b32.xlu0 %v501, 124
    %v533 = vpop.permute.xlu0 %532
    %534 = vrot.lane.b32.xlu0 %v502, 124
    %v535 = vpop.permute.xlu0 %534
    %v536 = vsel %vm209, %v533, %v535
    %v537 = vsel %vm209, %v535, %v533
    %v538 = vmul.f32 %v536, %v105
    %v539 = vmul.f32 %v537, %v106
    %v540 = vpack.c.bf16 %v539, %v538
    %541 = vrot.lane.b32.xlu0 %v501, 123
    %v542 = vpop.permute.xlu0 %541
    %543 = vrot.lane.b32.xlu0 %v502, 123
    %v544 = vpop.permute.xlu0 %543
    %v545 = vsel %vm219, %v542, %v544
    %v546 = vsel %vm219, %v544, %v542
    %v547 = vmul.f32 %v545, %v111
    %v548 = vmul.f32 %v546, %v112
    %v549 = vpack.c.bf16 %v548, %v547
    %550 = vrot.lane.b32.xlu0 %v501, 122
    %v551 = vpop.permute.xlu0 %550
    %552 = vrot.lane.b32.xlu0 %v502, 122
    %v553 = vpop.permute.xlu0 %552
    %v554 = vsel %vm229, %v551, %v553
    %v555 = vsel %vm229, %v553, %v551
    %v556 = vmul.f32 %v554, %v117
    %v557 = vmul.f32 %v555, %v118
    %v558 = vpack.c.bf16 %v557, %v556
    %559 = vrot.lane.b32.xlu0 %v501, 121
    %v560 = vpop.permute.xlu0 %559
    %561 = vrot.lane.b32.xlu0 %v502, 121
    %v562 = vpop.permute.xlu0 %561
    %v563 = vsel %vm239, %v560, %v562
    %v564 = vsel %vm239, %v562, %v560
    %v565 = vmul.f32 %v563, %v123
    %v566 = vmul.f32 %v564, %v124
    %v567 = vpack.c.bf16 %v566, %v565
    %568 = vrot.lane.b32.xlu0 %v501, 120
    %v569 = vpop.permute.xlu0 %568
    %570 = vrot.lane.b32.xlu0 %v502, 120
    %v571 = vpop.permute.xlu0 %570
    %v572 = vsel %vm249, %v569, %v571
    %v573 = vsel %vm249, %v571, %v569
    %v574 = vmul.f32 %v572, %v129
    %v575 = vmul.f32 %v573, %v130
    %v576 = vpack.c.bf16 %v575, %v574
    %577 = vrot.lane.b32.xlu0 %v501, 119
    %v578 = vpop.permute.xlu0 %577
    %579 = vrot.lane.b32.xlu0 %v502, 119
    %v580 = vpop.permute.xlu0 %579
    %v581 = vsel %vm259, %v578, %v580
    %v582 = vsel %vm259, %v580, %v578
    %v583 = vmul.f32 %v581, %v135
    %v584 = vmul.f32 %v582, %v136
    %v585 = vpack.c.bf16 %v584, %v583
    %586 = vrot.lane.b32.xlu0 %v501, 118
    %v587 = vpop.permute.xlu0 %586
    %588 = vrot.lane.b32.xlu0 %v502, 118
    %v589 = vpop.permute.xlu0 %588
    %v590 = vsel %vm269, %v587, %v589
    %v591 = vsel %vm269, %v589, %v587
    %v592 = vmul.f32 %v590, %v141
    %v593 = vmul.f32 %v591, %v142
    %v594 = vpack.c.bf16 %v593, %v592
    %595 = vrot.lane.b32.xlu0 %v501, 117
    %v596 = vpop.permute.xlu0 %595
    %597 = vrot.lane.b32.xlu0 %v502, 117
    %v598 = vpop.permute.xlu0 %597
    %v599 = vsel %vm279, %v596, %v598
    %v600 = vsel %vm279, %v598, %v596
    %v601 = vmul.f32 %v599, %v147
    %v602 = vmul.f32 %v600, %v148
    %v603 = vpack.c.bf16 %v602, %v601
    %604 = vrot.lane.b32.xlu0 %v501, 116
    %v605 = vpop.permute.xlu0 %604
    %606 = vrot.lane.b32.xlu0 %v502, 116
    %v607 = vpop.permute.xlu0 %606
    %v608 = vsel %vm289, %v605, %v607
    %v609 = vsel %vm289, %v607, %v605
    %v610 = vmul.f32 %v608, %v153
    %v611 = vmul.f32 %v609, %v154
    %v612 = vpack.c.bf16 %v611, %v610
    %613 = vrot.lane.b32.xlu0 %v501, 115
    %v614 = vpop.permute.xlu0 %613
    %615 = vrot.lane.b32.xlu0 %v502, 115
    %v616 = vpop.permute.xlu0 %615
    %v617 = vsel %vm299, %v614, %v616
    %v618 = vsel %vm299, %v616, %v614
    %v619 = vmul.f32 %v617, %v159
    %v620 = vmul.f32 %v618, %v160
    %v621 = vpack.c.bf16 %v620, %v619
    %622 = vrot.lane.b32.xlu0 %v501, 114
    %v623 = vpop.permute.xlu0 %622
    %624 = vrot.lane.b32.xlu0 %v502, 114
    %v625 = vpop.permute.xlu0 %624
    %v626 = vsel %vm309, %v623, %v625
    %v627 = vsel %vm309, %v625, %v623
    %v628 = vmul.f32 %v626, %v165
    %v629 = vmul.f32 %v627, %v166
    %v630 = vpack.c.bf16 %v629, %v628
    %631 = vrot.lane.b32.xlu0 %v501, 113
    %v632 = vpop.permute.xlu0 %631
    %633 = vrot.lane.b32.xlu0 %v502, 113
    %v634 = vpop.permute.xlu0 %633
    %v635 = vsel %vm319, %v632, %v634
    %v636 = vsel %vm319, %v634, %v632
    %v637 = vmul.f32 %v635, %v171
    %v638 = vmul.f32 %v636, %v172
    %v639 = vpack.c.bf16 %v638, %v637
    %v641 = vunpack.c.l.b16 %v504
    %v642 = vunpack.c.h.b16 %v504
    %v643 = vpack.c.b16 %v641, %v641
    %v644 = vpack.c.b16 %v642, %v642
    %v646 = vunpack.c.l.b16 %v513
    %v647 = vunpack.c.h.b16 %v513
    %v648 = vpack.c.b16 %v646, %v646
    %v649 = vpack.c.b16 %v647, %v647
    %v651 = vunpack.c.l.b16 %v522
    %v652 = vunpack.c.h.b16 %v522
    %v653 = vpack.c.b16 %v651, %v651
    %v654 = vpack.c.b16 %v652, %v652
    %v656 = vunpack.c.l.b16 %v531
    %v657 = vunpack.c.h.b16 %v531
    %v658 = vpack.c.b16 %v656, %v656
    %v659 = vpack.c.b16 %v657, %v657
    %v661 = vunpack.c.l.b16 %v540
    %v662 = vunpack.c.h.b16 %v540
    %v663 = vpack.c.b16 %v661, %v661
    %v664 = vpack.c.b16 %v662, %v662
    %v666 = vunpack.c.l.b16 %v549
    %v667 = vunpack.c.h.b16 %v549
    %v668 = vpack.c.b16 %v666, %v666
    %v669 = vpack.c.b16 %v667, %v667
    %v671 = vunpack.c.l.b16 %v558
    %v672 = vunpack.c.h.b16 %v558
    %v673 = vpack.c.b16 %v671, %v671
    %v674 = vpack.c.b16 %v672, %v672
    %v676 = vunpack.c.l.b16 %v567
    %v677 = vunpack.c.h.b16 %v567
    %v678 = vpack.c.b16 %v676, %v676
    %v679 = vpack.c.b16 %v677, %v677
    %v681 = vunpack.c.l.b16 %v576
    %v682 = vunpack.c.h.b16 %v576
    %v683 = vpack.c.b16 %v681, %v681
    %v684 = vpack.c.b16 %v682, %v682
    %v686 = vunpack.c.l.b16 %v585
    %v687 = vunpack.c.h.b16 %v585
    %v688 = vpack.c.b16 %v686, %v686
    %v689 = vpack.c.b16 %v687, %v687
    %v691 = vunpack.c.l.b16 %v594
    %v692 = vunpack.c.h.b16 %v594
    %v693 = vpack.c.b16 %v691, %v691
    %v694 = vpack.c.b16 %v692, %v692
    %v696 = vunpack.c.l.b16 %v603
    %v697 = vunpack.c.h.b16 %v603
    %v698 = vpack.c.b16 %v696, %v696
    %v699 = vpack.c.b16 %v697, %v697
    %v701 = vunpack.c.l.b16 %v612
    %v702 = vunpack.c.h.b16 %v612
    %v703 = vpack.c.b16 %v701, %v701
    %v704 = vpack.c.b16 %v702, %v702
    %v706 = vunpack.c.l.b16 %v621
    %v707 = vunpack.c.h.b16 %v621
    %v708 = vpack.c.b16 %v706, %v706
    %v709 = vpack.c.b16 %v707, %v707
    %v711 = vunpack.c.l.b16 %v630
    %v712 = vunpack.c.h.b16 %v630
    %v713 = vpack.c.b16 %v711, %v711
    %v714 = vpack.c.b16 %v712, %v712
    %v716 = vunpack.c.l.b16 %v639
    %v717 = vunpack.c.h.b16 %v639
    %v718 = vpack.c.b16 %v716, %v716
    %v719 = vpack.c.b16 %v717, %v717
    %v722 = vsel %vm53, %v643, %v648
    %v726 = vsel %vm53, %v644, %v649
    %v730 = vsel %vm53, %v653, %v658
    %v734 = vsel %vm53, %v654, %v659
    %v738 = vsel %vm53, %v663, %v668
    %v742 = vsel %vm53, %v664, %v669
    %v746 = vsel %vm53, %v673, %v678
    %v750 = vsel %vm53, %v674, %v679
    %v754 = vsel %vm53, %v683, %v688
    %v758 = vsel %vm53, %v684, %v689
    %v762 = vsel %vm53, %v693, %v698
    %v766 = vsel %vm53, %v694, %v699
    %v770 = vsel %vm53, %v703, %v708
    %v774 = vsel %vm53, %v704, %v709
    %v778 = vsel %vm53, %v713, %v718
    %v782 = vsel %vm53, %v714, %v719
    %784 = vmatpush.bf16.msra.mxu0 %v778
    %785 = vmatpush.bf16.msra.mxu0 %v770
    %786 = vmatpush.bf16.msra.mxu0 %v762
    %787 = vmatpush.bf16.msra.mxu0 %v754
    %788 = vmatpush.bf16.msra.mxu0 %v746
    %789 = vmatpush.bf16.msra.mxu0 %v738
    %790 = vmatpush.bf16.msra.mxu0 %v730
    %791 = vmatpush.bf16.msra.mxu0 %v722
    %792 = vmatmul.bf16.gmra.mxu0 %v503
    %v793 = vpop.f32.mrf.mxu0
    %v794 = vadd.f32 %v54, %v793
    %v795 = vpop.f32.mrf.mxu0
    %796 = vdwg.mxu0
    %797 = vmatpush.bf16.msra.mxu0 %v782
    %798 = vmatpush.bf16.msra.mxu0 %v774
    %799 = vmatpush.bf16.msra.mxu0 %v766
    %800 = vmatpush.bf16.msra.mxu0 %v758
    %801 = vmatpush.bf16.msra.mxu0 %v750
    %802 = vmatpush.bf16.msra.mxu0 %v742
    %803 = vmatpush.bf16.msra.mxu0 %v734
    %804 = vmatpush.bf16.msra.mxu0 %v726
    %805 = vmatmul.bf16.gmra.mxu0 %v503
    %v806 = vpop.f32.mrf.mxu0
    %v807 = vadd.f32 %v55, %v806
    %v808 = vpop.f32.mrf.mxu0
    %809 = vdwg.mxu0
    %810 = vst [vmem:[#allocation7] sm:$0xff] %v794
    %811 = vst [vmem:[#allocation7 + $0x8] sm:$0xff] %v807
    // Predicated region
    $region26: #{tpu_custom_call.1} parent=1 // pred_check
      _
    $region27: #{tpu_custom_call.1} parent=1 // pred_check_branch
      %813 = sbr.rel (0) target = $region29
    $region28: #{tpu_custom_call.1} parent=1 // pred_region
      %815 = vsyncadd [#allocation4], 0
      %s817 = sshll.u32 [#allocation7], 4
      %s818 = int_to_ptr.vmem [resolvable:$true] %s817
      %s819 = sshll.u32 %s4, 4
      %s820 = int_to_ptr.hbm [resolvable:$true] %s819
      %822 = dma.vmem_to_hbm [thread:$0]  %s818, 256, %s820, [#allocation4]
    $region29: #{tpu_custom_call.1} parent=1 // pred_fallthru
      _
    // Predicated region
    $region30: #{tpu_custom_call.1} parent=1 // pred_check
      _
    $region31: #{tpu_custom_call.1} parent=1 // pred_check_branch
      %824 = sbr.rel (0) target = $region33
    $region32: #{tpu_custom_call.1} parent=1 // pred_region
      %826 = dma.done [#allocation4], 256
    $region33: #{tpu_custom_call.1} parent=1 // pred_fallthru
      _
    %827 = vsyncpa [#allocation3], 1
    %828 = vsyncpa [#allocation6], 1
    %829 = vsyncpa [#allocation4], 1

</llo_original>
